<compile_context>
chip_gen: v7x
topology: tpu7x:2x2x1
jax: 0.10.0
libtpu: 0.0.40
codegen_flags: <defaults>
</compile_context>

<pallas_src>
import math
import numpy as np
import jax
import jax.numpy as jnp
from jax.experimental import pallas as pl
from jax.experimental.pallas import tpu as pltpu

_LANES = 128
_VMEM_LIMIT = 32 * 1024 * 1024  # explicit scoped-VMEM limit (safe on v5e/v6e/v7x)


# ------------------------- Pallas kernels ------------------------- #

def _xw_kernel(x_ref, w_ref, o_ref):
    # (TM, D) @ (D, 128) -> (TM, 128) lane-dense; real weight lives in column 0.
    o_ref[...] = jnp.dot(
        x_ref[...], w_ref[...], preferred_element_type=jnp.float32
    ).astype(o_ref.dtype)


def _score_kernel(a_ref, xw_ref, b_ref, o_ref):
    # Row-tile of the dense SpMM: (TM, N) bf16 @ (N, 128) bf16 -> (TM, 128) f32, + SMEM bias.
    o_ref[...] = (
        jnp.dot(a_ref[...], xw_ref[...], preferred_element_type=jnp.float32) + b_ref[0]
    )


def _gather_scale_kernel(perm_ref, f_ref, s_ref, o_ref):
    # f_ref: (1, D) = feature[perm[i]], s_ref: (1, 128) = score row (col 0 is the score).
    del perm_ref  # only used by the index_maps
    i = pl.program_id(0)
    o_ref[pl.ds(i, 1), :] = f_ref[...] * jnp.tanh(s_ref[0:1, 0:1])


# ------------------------- wrappers ------------------------- #

def graphconv_score(a_norm, x, w, b, *, tile_m=256):
    """GraphConv(in_dim, 1) score, lane-padded to (N, 128); column 0 is the score."""
    N, D = x.shape
    tm = min(tile_m, N)
    grid_m = pl.cdiv(N, tm)

    a_bf = a_norm.astype(jnp.bfloat16)
    x_bf = x.astype(jnp.bfloat16)
    w_pad = jnp.zeros((D, _LANES), jnp.bfloat16).at[:, 0:1].set(w.astype(jnp.bfloat16))

    params = pltpu.CompilerParams(
        dimension_semantics=("parallel",), vmem_limit_bytes=_VMEM_LIMIT
    )

    # xw = X @ W_pad  (computed once, re-used as a resident VMEM slab below)
    xw = pl.pallas_call(
        _xw_kernel,
        out_shape=jax.ShapeDtypeStruct((N, _LANES), jnp.bfloat16),
        grid=(grid_m,),
        in_specs=[
            pl.BlockSpec((tm, D), lambda i: (i, 0)),
            pl.BlockSpec((D, _LANES), lambda i: (0, 0)),
        ],
        out_specs=pl.BlockSpec((tm, _LANES), lambda i: (i, 0)),
        compiler_params=params,
    )(x_bf, w_pad)

    # score_dense = A_norm @ xw + b, row-tiled over N
    score_dense = pl.pallas_call(
        _score_kernel,
        out_shape=jax.ShapeDtypeStruct((N, _LANES), jnp.float32),
        grid=(grid_m,),
        in_specs=[
            pl.BlockSpec((tm, N), lambda i: (i, 0)),
            pl.BlockSpec((N, _LANES), lambda i: (0, 0)),          # resident, DMA'd once
            pl.BlockSpec(memory_space=pltpu.MemorySpace.SMEM),    # bias scalar
        ],
        out_specs=pl.BlockSpec((tm, _LANES), lambda i: (i, 0)),
        compiler_params=params,
    )(a_bf, xw, b)
    return score_dense


def gather_scale(feature, score_dense, perm, k_total):
    """feature[perm] * tanh(score[perm]) fused: perm is scalar-prefetched, rows are
    gathered with pl.Element BlockSpecs (no separate XLA gather round-trip)."""
    N, D = feature.shape
    return pl.pallas_call(
        _gather_scale_kernel,
        out_shape=jax.ShapeDtypeStruct((k_total, D), jnp.float32),
        grid_spec=pltpu.PrefetchScalarGridSpec(
            num_scalar_prefetch=1,
            grid=(k_total,),
            in_specs=[
                pl.BlockSpec((pl.Element(1), D), lambda i, p: (p[i], 0)),
                pl.BlockSpec((pl.Element(1), _LANES), lambda i, p: (p[i], 0)),
            ],
            out_specs=pl.BlockSpec((k_total, D), lambda i, p: (0, 0)),  # resident output
        ),
        compiler_params=pltpu.CompilerParams(
            dimension_semantics=("arbitrary",), vmem_limit_bytes=_VMEM_LIMIT
        ),
    )(perm, feature, score_dense)


# ------------------------- topk (mirrors the PyTorch helper) ------------------------- #

def topk(score, ratio, num_nodes):
    """num_nodes is a static numpy int array (batch_num_nodes of the batched graph)."""
    batch_size = len(num_nodes)
    max_n = int(num_nodes.max())
    cum = np.concatenate([[0], np.cumsum(num_nodes)[:-1]]).astype(np.int64)
    batch_id = np.concatenate(
        [np.full(int(n), i, dtype=np.int64) for i, n in enumerate(num_nodes)]
    )
    index = np.arange(score.shape[0], dtype=np.int64) - cum[batch_id] + batch_id * max_n

    dense = jnp.full((batch_size * max_n,), jnp.finfo(score.dtype).min, dtype=score.dtype)
    dense = dense.at[jnp.asarray(index)].set(score)
    dense = dense.reshape(batch_size, max_n)

    perm = jnp.argsort(-dense, axis=-1)                 # descending sort per graph
    perm = perm + jnp.asarray(cum).reshape(-1, 1)
    perm = perm.reshape(-1)

    k = np.ceil(ratio * num_nodes.astype(np.float64)).astype(np.int64)
    mask = np.concatenate(
        [np.arange(int(k[i]), dtype=np.int64) + i * max_n for i in range(batch_size)]
    )
    perm = perm[jnp.asarray(mask)]
    return perm, k


# ------------------------- SAGPool forward ------------------------- #

def sag_pool_forward(a_norm, feature, num_nodes, w, b, ratio=0.5):
    score_dense = graphconv_score(a_norm, feature, w, b)        # (N, 128), col 0 = score
    score = score_dense[:, 0]                                    # .squeeze()
    perm, k = topk(score, ratio, num_nodes)
    k_total = int(k.sum())
    perm = perm.astype(jnp.int32)
    feature_out = gather_scale(feature, score_dense, perm, k_total)  # fused gather + tanh-scale
    # TODO(synk): dgl.node_subgraph / set_batch_num_nodes (dynamic graph construction) has no
    # Pallas equivalent; we return perm and the new per-graph node counts instead.
    return feature_out, perm, k


# ------------------------- example / self-test ------------------------- #

if __name__ == "__main__":
    in_dim = 32
    ratio = 0.5
    num_nodes = np.array([10, 6], dtype=np.int64)     # batch of 2 graphs
    N = int(num_nodes.sum())

    key = jax.random.PRNGKey(0)
    k_feat, k_w = jax.random.split(key, 2)
    feature = jax.random.normal(k_feat, (N, in_dim), dtype=jnp.float32)

    # GraphConv(in_dim, 1) parameters (xavier-ish weight, zero bias like DGL).
    w = jax.random.normal(k_w, (in_dim, 1), dtype=jnp.float32) * (1.0 / math.sqrt(in_dim))
    b = jnp.zeros((1,), dtype=jnp.float32)

    # Deterministic random block-diagonal adjacency (edges only within each graph).
    adj = np.zeros((N, N), dtype=np.float32)
    rng = np.random.default_rng(0)
    off = 0
    for n in num_nodes:
        n = int(n)
        blk = (rng.random((n, n)) < 0.4).astype(np.float32)
        np.fill_diagonal(blk, 0.0)
        adj[off:off + n, off:off + n] = blk
        off += n

    # DGL GraphConv norm='both' normalization, degrees clamped to min 1.
    d_out = np.clip(adj.sum(axis=0), 1.0, None)
    d_in = np.clip(adj.sum(axis=1), 1.0, None)
    a_norm = adj * (d_out ** -0.5)[None, :] * (d_in ** -0.5)[:, None]
    a_norm = jnp.asarray(a_norm, dtype=jnp.float32)

    feature_out, perm, k = sag_pool_forward(a_norm, feature, num_nodes, w, b, ratio=ratio)
    jax.block_until_ready(feature_out)
    jax.block_until_ready(perm)

    assert feature_out.shape == (int(k.sum()), in_dim)
    assert perm.shape == (int(k.sum()),)
    assert bool(jnp.all(jnp.isfinite(feature_out)))
    print("KERNEL_OK")
</pallas_src>

<mosaic_0001>
module attributes {stable_mosaic.version = 11 : i64} {
  func.func @_xw_kernel(%arg0: i32, %arg1: memref<16x32xbf16, #tpu.memory_space<vmem>>, %arg2: memref<32x128xbf16, #tpu.memory_space<vmem>>, %arg3: memref<16x128xbf16, #tpu.memory_space<vmem>>) attributes {dimension_semantics = [#tpu.dimension_semantics<parallel>], iteration_bounds = array<i64: 1>, scalar_prefetch = 0 : i64, scratch_operands = 0 : i64, tpu.core_type = #tpu.core_type<tc>, window_params = [{transform_indices = @transform_0, window_bounds = array<i64: 16, 32>}, {pipeline_mode = #tpu.pipeline_mode<synchronous>, transform_indices = @transform_1, window_bounds = array<i64: 32, 128>}, {transform_indices = @transform_2, window_bounds = array<i64: 16, 128>}]} {
    %c0 = arith.constant 0 : index
    %c0_0 = arith.constant 0 : index
    %0 = vector.load %arg1[%c0, %c0_0] : memref<16x32xbf16, #tpu.memory_space<vmem>>, vector<16x32xbf16>
    %c0_1 = arith.constant 0 : index
    %c0_2 = arith.constant 0 : index
    %1 = vector.load %arg2[%c0_1, %c0_2] : memref<32x128xbf16, #tpu.memory_space<vmem>>, vector<32x128xbf16>
    %cst = arith.constant dense<0.000000e+00> : vector<16x128xf32>
    %2 = tpu.matmul %0, %1, %cst {dimension_numbers = #tpu.dot_dimension_numbers<[1], [0], [0], [1], [0, 0, 1, 1], [], []>} : vector<16x32xbf16>, vector<32x128xbf16>, vector<16x128xf32> -> vector<16x128xf32>
    %3 = arith.truncf %2 : vector<16x128xf32> to vector<16x128xbf16>
    %c0_3 = arith.constant 0 : index
    %c0_4 = arith.constant 0 : index
    %4 = vector.load %arg3[%c0_3, %c0_4] : memref<16x128xbf16, #tpu.memory_space<vmem>>, vector<16x128xbf16>
    tpu.vector_store %arg3[%c0_3, %c0_4], %3 {strides = array<i32>} : memref<16x128xbf16, #tpu.memory_space<vmem>>, vector<16x128xbf16>,
    return
  }
  func.func @transform_0(%arg0: i32) -> (i32, i32) {
    %c0_i32 = arith.constant 0 : i32
    %c0_i32_0 = arith.constant 0 : i32
    return %arg0, %c0_i32 : i32, i32
  }
  func.func @transform_1(%arg0: i32) -> (i32, i32) {
    %c0_i32 = arith.constant 0 : i32
    %c0_i32_0 = arith.constant 0 : i32
    %c0_i32_1 = arith.constant 0 : i32
    return %c0_i32, %c0_i32_0 : i32, i32
  }
  func.func @transform_2(%arg0: i32) -> (i32, i32) {
    %c0_i32 = arith.constant 0 : i32
    %c0_i32_0 = arith.constant 0 : i32
    return %arg0, %c0_i32 : i32, i32
  }
}

</mosaic_0001>

<llo_original>
// kernel: tpu_custom_call.1
$region0: #{tpu_custom_call.1}
  #allocation0 [shape = 'u32[]', space=smem, size = 0x4, offset = 0x4, fixed_abs, tag = 'smem constant byte address 0x4 - core index']
  #allocation1 [shape = 'u32[144,128]{1,0:T(1,128)}', space=vmem, size = 0x12000, scoped, tag = 'internal scratch']
  %s0 = inlined_call_operand.hbm [shape: bf16[16,32], index: 0, kind: input, shape index: {}]
  %s1 = inlined_call_operand.hbm [shape: bf16[32,128], index: 1, kind: input, shape index: {}]
  %s2 = inlined_call_operand.hbm [shape: bf16[16,128], index: 2, kind: output, shape index: {}]
  %s3 = sld [smem:[#allocation0]]
  $region26: #{tpu_custom_call.1} parent=0
    _
  %s5 = ssub.s32 1, %s3
  %s6 = scalar_select 0, %s5, %s3
  $region1: #{tpu_custom_call.1} parent=0
    #allocation2 [shape = 'u8[4096]{0}', space=vmem, size = 0x1000, scoped, tag = 'input window, operand 0, single buffered']
    #allocation3 [shape = 's32[1]{0}', space=sflag, size = 0x4, scoped, tag = 'scoped memory for tpu_custom_call.1']
    #allocation4 [shape = 's32[1]{0}', space=sflag, size = 0x4, scoped, tag = 'scoped memory for tpu_custom_call.1']
    #allocation5 [shape = 'u8[8192]{0}', space=vmem, size = 0x2000, scoped, tag = 'input window, operand 1, single buffered']
    #allocation6 [shape = 's32[1]{0}', space=sflag, size = 0x4, scoped, tag = 'scoped memory for tpu_custom_call.1']
    #allocation7 [shape = 'u8[4096]{0}', space=vmem, size = 0x1000, scoped, tag = 'output window, operand 0, single buffered']
    %7 = vsyncpa [#allocation3], 0
    %8 = vsyncpa [#allocation6], 0
    %9 = vsyncpa [#allocation4], 0
    // Predicated region
    $region2: #{tpu_custom_call.1} parent=1 // pred_check
      _
    $region3: #{tpu_custom_call.1} parent=1 // pred_check_branch
      %11 = sbr.rel (0) target = $region5
    $region4: #{tpu_custom_call.1} parent=1 // pred_region
      %s13 = ssub.s32 128, 128
      %14 = vsyncadd [#allocation3], %s13
      %s15 = sshll.u32 [#allocation2], 4
      %s16 = int_to_ptr.vmem [resolvable:$true] %s15
      %21 = dma.hbm_to_vmem [thread:$0]  %s0, 128, %s16, [#allocation3], 64, 64, 4
    $region5: #{tpu_custom_call.1} parent=1 // pred_fallthru
      _
    // Predicated region
    $region6: #{tpu_custom_call.1} parent=1 // pred_check
      _
    $region7: #{tpu_custom_call.1} parent=1 // pred_check_branch
      %23 = sbr.rel (0) target = $region9
    $region8: #{tpu_custom_call.1} parent=1 // pred_region
      %s25 = ssub.s32 256, 256
      %26 = vsyncadd [#allocation6], %s25
      %s27 = sshll.u32 [#allocation5], 4
      %s28 = int_to_ptr.vmem [resolvable:$true] %s27
      %33 = dma.hbm_to_vmem [thread:$0]  %s1, 256, %s28, [#allocation6], 64, 64, 4
    $region9: #{tpu_custom_call.1} parent=1 // pred_fallthru
      _
    // Predicated region
    $region10: #{tpu_custom_call.1} parent=1 // pred_check
      _
    $region11: #{tpu_custom_call.1} parent=1 // pred_check_branch
      %35 = sbr.rel (0) target = $region13
    $region12: #{tpu_custom_call.1} parent=1 // pred_region
      %36 = dma.done [#allocation3], 128
    $region13: #{tpu_custom_call.1} parent=1 // pred_fallthru
      _
    // Predicated region
    $region14: #{tpu_custom_call.1} parent=1 // pred_check
      _
    $region15: #{tpu_custom_call.1} parent=1 // pred_check_branch
      %38 = sbr.rel (0) target = $region17
    $region16: #{tpu_custom_call.1} parent=1 // pred_region
      %39 = dma.done [#allocation6], 256
    $region17: #{tpu_custom_call.1} parent=1 // pred_fallthru
      _
    %v41 = vld [vmem:[#allocation2] sm:$0xf]
    %v42 = vld [vmem:[#allocation2 + $0x4] sm:$0xf]
    %v43 = vld [vmem:[#allocation5] sm:$0xf]
    %v44 = vld [vmem:[#allocation5 + $0x4] sm:$0xf]
    %v45 = vld [vmem:[#allocation5 + $0x8] sm:$0xf]
    %v46 = vld [vmem:[#allocation5 + $0xc] sm:$0xf]
    %v49 = vunpack.c.l.b16 %v41
    %v50 = vunpack.c.l.b16 %v42
    %v51 = vpack.c.b16 %v50, %v49
    %v56 = vunpack.c.l.b16 %v43
    %v57 = vunpack.c.l.b16 %v44
    %v58 = vunpack.c.l.b16 %v45
    %v59 = vunpack.c.l.b16 %v46
    %v60 = vpack.c.b16 %v57, %v56
    %v61 = vpack.c.b16 %v59, %v58
    %vm64 = vcmask 261120
    %v66 = vsel %vm64, %v51, 0
    %68 = vmatprep.subr.bf16.mxu0 0
    %69 = vmatpush1.bf16.msra.mxu0 %v60
    %70 = vmatprep.subr.bf16.mxu0 0
    %71 = vmatpush1.bf16.msra.mxu0 %v61
    %72 = vmatprep.subr.bf16.mxu0 0
    %73 = vmatpush1.bf16.msra.mxu0 0
    %74 = vmatprep.subr.bf16.mxu0 0
    %75 = vmatpush1.bf16.msra.mxu0 0
    %76 = vmatprep.subr.bf16.mxu0 0
    %77 = vmatpush1.bf16.msra.mxu0 0
    %78 = vmatprep.subr.bf16.mxu0 0
    %79 = vmatpush1.bf16.msra.mxu0 0
    %80 = vmatprep.subr.bf16.mxu0 0
    %81 = vmatpush1.bf16.msra.mxu0 0
    %82 = vmatprep.subr.bf16.mxu0 0
    %83 = vmatpush1.bf16.msra.mxu0 0
    %84 = vmatprep.subr.bf16.mxu0 0
    %85 = vmatpush1.bf16.msra.mxu0 0
    %86 = vmatprep.subr.bf16.mxu0 0
    %87 = vmatpush1.bf16.msra.mxu0 0
    %88 = vmatprep.subr.bf16.mxu0 0
    %89 = vmatpush1.bf16.msra.mxu0 0
    %90 = vmatprep.subr.bf16.mxu0 0
    %91 = vmatpush1.bf16.msra.mxu0 0
    %92 = vmatprep.subr.bf16.mxu0 0
    %93 = vmatpush1.bf16.msra.mxu0 0
    %94 = vmatprep.subr.bf16.mxu0 0
    %95 = vmatpush1.bf16.msra.mxu0 0
    %96 = vmatprep.subr.bf16.mxu0 0
    %97 = vmatpush1.bf16.msra.mxu0 0
    %98 = vmatprep.subr.bf16.mxu0 0
    %99 = vmatpush1.bf16.msra.mxu0 0
    %100 = vmatprep.mubr.bf16.mxu0 0
    %101 = vmatmul.mubr.bf16.gmra.mrb[0].mxu0 %v66
    %v102 = vpop.f32.mrb[0].mxu0
    %v103 = vadd.f32 0.0, %v102
    %v104 = vpop.f32.mrb[0].mxu0
    %v105 = vpop.f32.mrb[0].mxu0
    %v106 = vadd.f32 0.0, %v105
    %v107 = vpop.f32.mrb[0].mxu0
    %108 = vdwg.mxu0
    %v109 = vpack.c.bf16 %v106, %v103
    %v111 = vunpack.c.l.b16 %v109
    %v112 = vunpack.c.h.b16 %v109
    %v113 = vpack.c.b16 %v111, %v111
    %v114 = vpack.c.b16 %v112, %v112
    %117 = vst [vmem:[#allocation7] sm:$0xf] %v113
    %118 = vst [vmem:[#allocation7 + $0x4] sm:$0xf] %v114
    // Predicated region
    $region18: #{tpu_custom_call.1} parent=1 // pred_check
      _
    $region19: #{tpu_custom_call.1} parent=1 // pred_check_branch
      %120 = sbr.rel (0) target = $region21
    $region20: #{tpu_custom_call.1} parent=1 // pred_region
      %s122 = ssub.s32 128, 128
      %123 = vsyncadd [#allocation4], %s122
      %s124 = sshll.u32 [#allocation7], 4
      %s125 = int_to_ptr.vmem [resolvable:$true] %s124
      %130 = dma.vmem_to_hbm [thread:$0]  %s125, 128, %s2, [#allocation4], 64, 64, 4
    $region21: #{tpu_custom_call.1} parent=1 // pred_fallthru
      _
    // Predicated region
    $region22: #{tpu_custom_call.1} parent=1 // pred_check
      _
    $region23: #{tpu_custom_call.1} parent=1 // pred_check_branch
      %132 = sbr.rel (0) target = $region25
    $region24: #{tpu_custom_call.1} parent=1 // pred_region
      %133 = dma.done [#allocation4], 128
    $region25: #{tpu_custom_call.1} parent=1 // pred_fallthru
      _
    %134 = vsyncpa [#allocation3], 1
    %135 = vsyncpa [#allocation6], 1
    %136 = vsyncpa [#allocation4], 1

</llo_original>
